<compile_context>
chip_gen: v6e
topology: v6e:2x2x1
jax: 0.10.0
libtpu: 0.0.40
codegen_flags: <defaults>
</compile_context>

<pallas_src>
import functools

import jax
import jax.numpy as jnp
from jax import lax
from jax.experimental import pallas as pl
from jax.experimental.pallas import tpu as pltpu


def _round_up(x, m):
    return (x + m - 1) // m * m


def _sparse_conv_kernel(x_ref, w_ref, m_ref, o_ref, *, K, W, HW, p, use_bf16_mxu):
    """Single grid step covering the whole batch.

    x_ref: (N, Cin_pad, L)         flat zero-padded images, L = HW + 2*(p*W+p)
    w_ref: (Cout, K*K*Cin_pad + 1) block-diagonal packed weights, bias last col
    m_ref: (K, HW)                 per-kw left/right boundary masks (f32)
    o_ref: (N, Cout, HW)           lane-dense output (HW = H*W)
    """
    N = x_ref.shape[0]
    masks = m_ref[...]                                  # (K, HW), stays f32

    # im2col for every image; rows ordered (kh, kw, cin) matching w_ref.
    # Each chunk is (Cin_pad, HW) with Cin_pad a multiple of 8 -> sublane-aligned.
    per_image = []
    for n in range(N):
        xn = x_ref[n]                                   # (Cin_pad, L)
        rows = []
        for kh in range(K):
            for kw in range(K):
                off = kh * W + kw                       # static lane offset
                win = xn[:, off:off + HW]               # (Cin_pad, HW)
                if kw != p:                             # centre column never wraps
                    win = win * masks[kw:kw + 1, :]
                rows.append(win)
        per_image.append(jnp.concatenate(rows, axis=0))  # (K*K*Cin_pad, HW)

    patches = jnp.concatenate(per_image, axis=1)         # (CK, N*HW)
    ones_row = jnp.ones((1, patches.shape[1]), patches.dtype)
    patches = jnp.concatenate([patches, ones_row], axis=0)   # (CK+1, N*HW) bias row

    dot_dtype = jnp.bfloat16 if use_bf16_mxu else w_ref.dtype
    acc = jnp.dot(w_ref[...].astype(dot_dtype), patches.astype(dot_dtype),
                  preferred_element_type=jnp.float32)     # (Cout, N*HW) one MXU pass

    for n in range(N):                                    # lane-aligned slice stores
        o_ref[n] = acc[:, n * HW:(n + 1) * HW].astype(o_ref.dtype)


def pack_sparse_conv_params(w, b, H, W, dtype=jnp.float32):
    """One-time parameter packing (call at init, NOT per forward).

    w: (ns, K, K, Cin_g, Cout_g); b: (ns, Cout_g).
    Returns:
      w_mat: (Cout, K*K*Cin_pad + 1)  block-diagonal weights, bias in last col
      masks: (K, H*W)                 per-kw W-boundary masks (compile-time const)
    """
    ns, K, _, cin_g, cout_g = w.shape
    Cin, Cout = ns * cin_g, ns * cout_g
    Cin_pad = _round_up(Cin, 8)                           # sublane-aligned im2col
    p = K // 2
    HW = H * W

    w_full = jnp.zeros((Cout, K, K, Cin_pad), dtype)
    for g in range(ns):
        w_full = w_full.at[g * cout_g:(g + 1) * cout_g, :, :,
                           g * cin_g:(g + 1) * cin_g].set(
            jnp.transpose(w[g].astype(dtype), (3, 0, 1, 2)))  # (Cout_g, K, K, Cin_g)
    w_mat = w_full.reshape(Cout, K * K * Cin_pad)
    w_mat = jnp.concatenate([w_mat, b.reshape(Cout, 1).astype(dtype)], axis=1)

    col = jnp.arange(HW, dtype=jnp.int32) % W
    wcol = col[None, :] + (jnp.arange(K, dtype=jnp.int32)[:, None] - p)
    masks = ((wcol >= 0) & (wcol < W)).astype(dtype)
    return w_mat, masks


@functools.partial(jax.jit, static_argnames=("use_bf16_mxu",))
def sparse_conv_apply(x_nchw, w_mat, masks, use_bf16_mxu=False):
    """x_nchw: (N, Cin, H, W); w_mat/masks from pack_sparse_conv_params."""
    N, Cin, H, W = x_nchw.shape
    K, HW = masks.shape
    assert HW == H * W
    p = K // 2
    Cout = w_mat.shape[0]
    Cin_pad = (w_mat.shape[1] - 1) // (K * K)
    halo = p * W + p                                      # flat halo covers H padding
    L = HW + 2 * halo

    # Glue: flatten spatial (free), pad channels to Cin_pad and lanes by halo.
    x_flat = x_nchw.reshape(N, Cin, HW)
    x_pad = jnp.pad(x_flat, ((0, 0), (0, Cin_pad - Cin), (halo, halo)))

    cost = pl.CostEstimate(
        flops=2 * N * Cout * K * K * Cin * HW,
        transcendentals=0,
        bytes_accessed=(x_nchw.size + w_mat.size + masks.size + N * Cout * HW)
        * x_nchw.dtype.itemsize)

    out = pl.pallas_call(
        functools.partial(_sparse_conv_kernel, K=K, W=W, HW=HW, p=p,
                          use_bf16_mxu=use_bf16_mxu),
        out_shape=jax.ShapeDtypeStruct((N, Cout, HW), x_nchw.dtype),
        grid=(1,),                                        # whole batch in one step
        in_specs=[
            pl.BlockSpec((N, Cin_pad, L), lambda i: (0, 0, 0)),
            pl.BlockSpec(w_mat.shape, lambda i: (0, 0)),
            pl.BlockSpec(masks.shape, lambda i: (0, 0)),
        ],
        out_specs=pl.BlockSpec((N, Cout, HW), lambda i: (0, 0, 0)),
        compiler_params=pltpu.CompilerParams(
            dimension_semantics=("arbitrary",)),
        cost_estimate=cost,
    )(x_pad, w_mat, masks)

    # (N, Cout, H*W) -> NCHW: free reshape; channel order matches torch.cat(dim=1).
    return out.reshape(N, Cout, H, W)


def _reference(x_nchw, w, b):
    """Plain-JAX reference (lax conv per group) for validation."""
    ns = w.shape[0]
    chunks = jnp.split(x_nchw, ns, axis=1)
    ys = []
    for g in range(ns):
        w_oihw = jnp.transpose(w[g], (3, 2, 0, 1))        # (Cout_g, Cin_g, K, K)
        y = lax.conv_general_dilated(
            chunks[g], w_oihw, window_strides=(1, 1), padding="SAME",
            dimension_numbers=("NCHW", "OIHW", "NCHW"))
        ys.append(y + b[g][None, :, None, None])
    return jnp.concatenate(ys, axis=1)


if __name__ == "__main__":
    # Module config: SparseConv(in_channels=4, out_channels=8, kernel_size=3, nsplit=2)
    N, Cin, Cout, K, NSPLIT = 2, 4, 8, 3, 2
    H = W = 16
    cin_g, cout_g = Cin // NSPLIT, Cout // NSPLIT

    key = jax.random.PRNGKey(0)
    kx, kw_, kb = jax.random.split(key, 3)
    x = jax.random.normal(kx, (N, Cin, H, W), dtype=jnp.float32)
    fan_in = cin_g * K * K
    w = jax.random.normal(kw_, (NSPLIT, K, K, cin_g, cout_g),
                          dtype=jnp.float32) / jnp.sqrt(fan_in)
    b = jax.random.normal(kb, (NSPLIT, cout_g), dtype=jnp.float32) * 0.1

    # One-time packing (hoisted out of the per-call path).
    w_mat, masks = pack_sparse_conv_params(w, b, H, W)

    y = sparse_conv_apply(x, w_mat, masks)
    y = jax.block_until_ready(y)

    y_ref = _reference(x, w, b)
    assert y.shape == (N, Cout, H, W), y.shape
    assert jnp.allclose(y, y_ref, atol=1e-4, rtol=1e-4), float(jnp.max(jnp.abs(y - y_ref)))

    print("KERNEL_OK")
</pallas_src>

<mosaic_0001>
module attributes {stable_mosaic.version = 11 : i64} {
  func.func @_sparse_conv_kernel(%arg0: i32, %arg1: memref<2x8x290xf32, #tpu.memory_space<vmem>>, %arg2: memref<8x73xf32, #tpu.memory_space<vmem>>, %arg3: memref<3x256xf32, #tpu.memory_space<vmem>>, %arg4: memref<2x8x256xf32, #tpu.memory_space<vmem>>) attributes {dimension_semantics = [#tpu.dimension_semantics<arbitrary>], iteration_bounds = array<i64: 1>, scalar_prefetch = 0 : i64, scratch_operands = 0 : i64, tpu.core_type = #tpu.core_type<tc>, window_params = [{pipeline_mode = #tpu.pipeline_mode<synchronous>, transform_indices = @transform_0, window_bounds = array<i64: 2, 8, 290>}, {pipeline_mode = #tpu.pipeline_mode<synchronous>, transform_indices = @transform_1, window_bounds = array<i64: 8, 73>}, {pipeline_mode = #tpu.pipeline_mode<synchronous>, transform_indices = @transform_2, window_bounds = array<i64: 3, 256>}, {pipeline_mode = #tpu.pipeline_mode<synchronous>, transform_indices = @transform_3, window_bounds = array<i64: 2, 8, 256>}]} {
    %c0 = arith.constant 0 : index
    %c0_0 = arith.constant 0 : index
    %0 = vector.load %arg3[%c0, %c0_0] : memref<3x256xf32, #tpu.memory_space<vmem>>, vector<3x256xf32>
    %c0_1 = arith.constant 0 : index
    %c0_2 = arith.constant 0 : index
    %c0_3 = arith.constant 0 : index
    %1 = vector.load %arg1[%c0_1, %c0_2, %c0_3] : memref<2x8x290xf32, #tpu.memory_space<vmem>>, vector<1x8x290xf32>
    %2 = vector.shape_cast %1 : vector<1x8x290xf32> to vector<8x290xf32>
    %3 = vector.extract_strided_slice %2 {offsets = [0, 0], sizes = [8, 256], strides = [1, 1]} : vector<8x290xf32> to vector<8x256xf32>
    %4 = vector.extract_strided_slice %0 {offsets = [0, 0], sizes = [1, 256], strides = [1, 1]} : vector<3x256xf32> to vector<1x256xf32>
    %5 = vector.broadcast %4 : vector<1x256xf32> to vector<8x256xf32>
    %6 = arith.mulf %3, %5 : vector<8x256xf32>
    %7 = vector.extract_strided_slice %2 {offsets = [0, 1], sizes = [8, 256], strides = [1, 1]} : vector<8x290xf32> to vector<8x256xf32>
    %8 = vector.extract_strided_slice %2 {offsets = [0, 2], sizes = [8, 256], strides = [1, 1]} : vector<8x290xf32> to vector<8x256xf32>
    %9 = vector.extract_strided_slice %0 {offsets = [2, 0], sizes = [1, 256], strides = [1, 1]} : vector<3x256xf32> to vector<1x256xf32>
    %10 = vector.broadcast %9 : vector<1x256xf32> to vector<8x256xf32>
    %11 = arith.mulf %8, %10 : vector<8x256xf32>
    %12 = vector.extract_strided_slice %2 {offsets = [0, 16], sizes = [8, 256], strides = [1, 1]} : vector<8x290xf32> to vector<8x256xf32>
    %13 = vector.extract_strided_slice %0 {offsets = [0, 0], sizes = [1, 256], strides = [1, 1]} : vector<3x256xf32> to vector<1x256xf32>
    %14 = vector.broadcast %13 : vector<1x256xf32> to vector<8x256xf32>
    %15 = arith.mulf %12, %14 : vector<8x256xf32>
    %16 = vector.extract_strided_slice %2 {offsets = [0, 17], sizes = [8, 256], strides = [1, 1]} : vector<8x290xf32> to vector<8x256xf32>
    %17 = vector.extract_strided_slice %2 {offsets = [0, 18], sizes = [8, 256], strides = [1, 1]} : vector<8x290xf32> to vector<8x256xf32>
    %18 = vector.extract_strided_slice %0 {offsets = [2, 0], sizes = [1, 256], strides = [1, 1]} : vector<3x256xf32> to vector<1x256xf32>
    %19 = vector.broadcast %18 : vector<1x256xf32> to vector<8x256xf32>
    %20 = arith.mulf %17, %19 : vector<8x256xf32>
    %21 = vector.extract_strided_slice %2 {offsets = [0, 32], sizes = [8, 256], strides = [1, 1]} : vector<8x290xf32> to vector<8x256xf32>
    %22 = vector.extract_strided_slice %0 {offsets = [0, 0], sizes = [1, 256], strides = [1, 1]} : vector<3x256xf32> to vector<1x256xf32>
    %23 = vector.broadcast %22 : vector<1x256xf32> to vector<8x256xf32>
    %24 = arith.mulf %21, %23 : vector<8x256xf32>
    %25 = vector.extract_strided_slice %2 {offsets = [0, 33], sizes = [8, 256], strides = [1, 1]} : vector<8x290xf32> to vector<8x256xf32>
    %26 = vector.extract_strided_slice %2 {offsets = [0, 34], sizes = [8, 256], strides = [1, 1]} : vector<8x290xf32> to vector<8x256xf32>
    %27 = vector.extract_strided_slice %0 {offsets = [2, 0], sizes = [1, 256], strides = [1, 1]} : vector<3x256xf32> to vector<1x256xf32>
    %28 = vector.broadcast %27 : vector<1x256xf32> to vector<8x256xf32>
    %29 = arith.mulf %26, %28 : vector<8x256xf32>
    %30 = tpu.concatenate %6, %7, %11, %15, %16, %20, %24, %25, %29 in 0 : vector<8x256xf32>, vector<8x256xf32>, vector<8x256xf32>, vector<8x256xf32>, vector<8x256xf32>, vector<8x256xf32>, vector<8x256xf32>, vector<8x256xf32>, vector<8x256xf32> -> vector<72x256xf32>
    %c1 = arith.constant 1 : index
    %c0_4 = arith.constant 0 : index
    %c0_5 = arith.constant 0 : index
    %31 = vector.load %arg1[%c1, %c0_4, %c0_5] : memref<2x8x290xf32, #tpu.memory_space<vmem>>, vector<1x8x290xf32>
    %32 = vector.shape_cast %31 : vector<1x8x290xf32> to vector<8x290xf32>
    %33 = vector.extract_strided_slice %32 {offsets = [0, 0], sizes = [8, 256], strides = [1, 1]} : vector<8x290xf32> to vector<8x256xf32>
    %34 = vector.extract_strided_slice %0 {offsets = [0, 0], sizes = [1, 256], strides = [1, 1]} : vector<3x256xf32> to vector<1x256xf32>
    %35 = vector.broadcast %34 : vector<1x256xf32> to vector<8x256xf32>
    %36 = arith.mulf %33, %35 : vector<8x256xf32>
    %37 = vector.extract_strided_slice %32 {offsets = [0, 1], sizes = [8, 256], strides = [1, 1]} : vector<8x290xf32> to vector<8x256xf32>
    %38 = vector.extract_strided_slice %32 {offsets = [0, 2], sizes = [8, 256], strides = [1, 1]} : vector<8x290xf32> to vector<8x256xf32>
    %39 = vector.extract_strided_slice %0 {offsets = [2, 0], sizes = [1, 256], strides = [1, 1]} : vector<3x256xf32> to vector<1x256xf32>
    %40 = vector.broadcast %39 : vector<1x256xf32> to vector<8x256xf32>
    %41 = arith.mulf %38, %40 : vector<8x256xf32>
    %42 = vector.extract_strided_slice %32 {offsets = [0, 16], sizes = [8, 256], strides = [1, 1]} : vector<8x290xf32> to vector<8x256xf32>
    %43 = vector.extract_strided_slice %0 {offsets = [0, 0], sizes = [1, 256], strides = [1, 1]} : vector<3x256xf32> to vector<1x256xf32>
    %44 = vector.broadcast %43 : vector<1x256xf32> to vector<8x256xf32>
    %45 = arith.mulf %42, %44 : vector<8x256xf32>
    %46 = vector.extract_strided_slice %32 {offsets = [0, 17], sizes = [8, 256], strides = [1, 1]} : vector<8x290xf32> to vector<8x256xf32>
    %47 = vector.extract_strided_slice %32 {offsets = [0, 18], sizes = [8, 256], strides = [1, 1]} : vector<8x290xf32> to vector<8x256xf32>
    %48 = vector.extract_strided_slice %0 {offsets = [2, 0], sizes = [1, 256], strides = [1, 1]} : vector<3x256xf32> to vector<1x256xf32>
    %49 = vector.broadcast %48 : vector<1x256xf32> to vector<8x256xf32>
    %50 = arith.mulf %47, %49 : vector<8x256xf32>
    %51 = vector.extract_strided_slice %32 {offsets = [0, 32], sizes = [8, 256], strides = [1, 1]} : vector<8x290xf32> to vector<8x256xf32>
    %52 = vector.extract_strided_slice %0 {offsets = [0, 0], sizes = [1, 256], strides = [1, 1]} : vector<3x256xf32> to vector<1x256xf32>
    %53 = vector.broadcast %52 : vector<1x256xf32> to vector<8x256xf32>
    %54 = arith.mulf %51, %53 : vector<8x256xf32>
    %55 = vector.extract_strided_slice %32 {offsets = [0, 33], sizes = [8, 256], strides = [1, 1]} : vector<8x290xf32> to vector<8x256xf32>
    %56 = vector.extract_strided_slice %32 {offsets = [0, 34], sizes = [8, 256], strides = [1, 1]} : vector<8x290xf32> to vector<8x256xf32>
    %57 = vector.extract_strided_slice %0 {offsets = [2, 0], sizes = [1, 256], strides = [1, 1]} : vector<3x256xf32> to vector<1x256xf32>
    %58 = vector.broadcast %57 : vector<1x256xf32> to vector<8x256xf32>
    %59 = arith.mulf %56, %58 : vector<8x256xf32>
    %60 = tpu.concatenate %36, %37, %41, %45, %46, %50, %54, %55, %59 in 0 : vector<8x256xf32>, vector<8x256xf32>, vector<8x256xf32>, vector<8x256xf32>, vector<8x256xf32>, vector<8x256xf32>, vector<8x256xf32>, vector<8x256xf32>, vector<8x256xf32> -> vector<72x256xf32>
    %61 = tpu.concatenate %30, %60 in 1 : vector<72x256xf32>, vector<72x256xf32> -> vector<72x512xf32>
    %cst = arith.constant 1.000000e+00 : f32
    %62 = vector.broadcast %cst : f32 to vector<1x512xf32>
    %63 = tpu.concatenate %61, %62 in 0 : vector<72x512xf32>, vector<1x512xf32> -> vector<73x512xf32>
    %c0_6 = arith.constant 0 : index
    %c0_7 = arith.constant 0 : index
    %64 = vector.load %arg2[%c0_6, %c0_7] : memref<8x73xf32, #tpu.memory_space<vmem>>, vector<8x73xf32>
    %cst_8 = arith.constant dense<0.000000e+00> : vector<8x512xf32>
    %65 = tpu.matmul %64, %63, %cst_8 {dimension_numbers = #tpu.dot_dimension_numbers<[1], [0], [0], [1], [0, 0, 1, 1], [], []>} : vector<8x73xf32>, vector<73x512xf32>, vector<8x512xf32> -> vector<8x512xf32>
    %66 = vector.extract_strided_slice %65 {offsets = [0, 0], sizes = [8, 256], strides = [1, 1]} : vector<8x512xf32> to vector<8x256xf32>
    %c0_9 = arith.constant 0 : index
    %c0_10 = arith.constant 0 : index
    %c0_11 = arith.constant 0 : index
    %67 = vector.load %arg4[%c0_9, %c0_10, %c0_11] : memref<2x8x256xf32, #tpu.memory_space<vmem>>, vector<1x8x256xf32>
    %68 = vector.shape_cast %67 : vector<1x8x256xf32> to vector<8x256xf32>
    %69 = vector.shape_cast %66 : vector<8x256xf32> to vector<1x8x256xf32>
    tpu.vector_store %arg4[%c0_9, %c0_10, %c0_11], %69 {strides = array<i32>} : memref<2x8x256xf32, #tpu.memory_space<vmem>>, vector<1x8x256xf32>,
    %70 = vector.extract_strided_slice %65 {offsets = [0, 256], sizes = [8, 256], strides = [1, 1]} : vector<8x512xf32> to vector<8x256xf32>
    %c1_12 = arith.constant 1 : index
    %c0_13 = arith.constant 0 : index
    %c0_14 = arith.constant 0 : index
    %71 = vector.load %arg4[%c1_12, %c0_13, %c0_14] : memref<2x8x256xf32, #tpu.memory_space<vmem>>, vector<1x8x256xf32>
    %72 = vector.shape_cast %71 : vector<1x8x256xf32> to vector<8x256xf32>
    %73 = vector.shape_cast %70 : vector<8x256xf32> to vector<1x8x256xf32>
    tpu.vector_store %arg4[%c1_12, %c0_13, %c0_14], %73 {strides = array<i32>} : memref<2x8x256xf32, #tpu.memory_space<vmem>>, vector<1x8x256xf32>,
    return
  }
  func.func @transform_0(%arg0: i32) -> (i32, i32, i32) {
    %c0_i32 = arith.constant 0 : i32
    %c0_i32_0 = arith.constant 0 : i32
    %c0_i32_1 = arith.constant 0 : i32
    %c0_i32_2 = arith.constant 0 : i32
    return %c0_i32, %c0_i32_0, %c0_i32_1 : i32, i32, i32
  }
  func.func @transform_1(%arg0: i32) -> (i32, i32) {
    %c0_i32 = arith.constant 0 : i32
    %c0_i32_0 = arith.constant 0 : i32
    %c0_i32_1 = arith.constant 0 : i32
    return %c0_i32, %c0_i32_0 : i32, i32
  }
  func.func @transform_2(%arg0: i32) -> (i32, i32) {
    %c0_i32 = arith.constant 0 : i32
    %c0_i32_0 = arith.constant 0 : i32
    %c0_i32_1 = arith.constant 0 : i32
    return %c0_i32, %c0_i32_0 : i32, i32
  }
  func.func @transform_3(%arg0: i32) -> (i32, i32, i32) {
    %c0_i32 = arith.constant 0 : i32
    %c0_i32_0 = arith.constant 0 : i32
    %c0_i32_1 = arith.constant 0 : i32
    %c0_i32_2 = arith.constant 0 : i32
    return %c0_i32, %c0_i32_0, %c0_i32_1 : i32, i32, i32
  }
}

</mosaic_0001>

<llo_original>
// kernel: sparse_conv_apply.1
$region0: #{sparse_conv_apply.1}
  #allocation0 [shape = 'u32[]', space=smem, size = 0x4, offset = 0x4, fixed_abs, tag = 'smem constant byte address 0x4 - core index']
  #allocation1 [shape = 'u32[144,128]{1,0:T(1,128)}', space=vmem, size = 0x12000, scoped, tag = 'internal scratch']
  %s0 = inlined_call_operand.vmem [shape: f32[2,8,290], index: 0, kind: input, shape index: {}]
  %s1 = inlined_call_operand.vmem [shape: f32[8,73], index: 1, kind: input, shape index: {}]
  %s2 = inlined_call_operand.vmem [shape: f32[3,256], index: 2, kind: input, shape index: {}]
  %s3 = inlined_call_operand.vmem [shape: f32[2,8,256], index: 3, kind: output, shape index: {}]
  %s4 = sld [smem:[#allocation0]]
  $region22: #{sparse_conv_apply.1} parent=0
    _
  %s6 = ssub.s32 1, %s4
  %s7 = scalar_select 0, %s6, %s4
  // Predicated region
  $region2: #{sparse_conv_apply.1} parent=0 // pred_check
    _
  $region3: #{sparse_conv_apply.1} parent=0 // pred_check_branch
    %9 = sbr.rel (0) target = $region5
  $region4: #{sparse_conv_apply.1} parent=0 // pred_region
    _
  $region5: #{sparse_conv_apply.1} parent=0 // pred_fallthru
    _
  // Predicated region
  $region6: #{sparse_conv_apply.1} parent=0 // pred_check
    _
  $region7: #{sparse_conv_apply.1} parent=0 // pred_check_branch
    %11 = sbr.rel (0) target = $region9
  $region8: #{sparse_conv_apply.1} parent=0 // pred_region
    _
  $region9: #{sparse_conv_apply.1} parent=0 // pred_fallthru
    _
  // Predicated region
  $region10: #{sparse_conv_apply.1} parent=0 // pred_check
    _
  $region11: #{sparse_conv_apply.1} parent=0 // pred_check_branch
    %13 = sbr.rel (0) target = $region13
  $region12: #{sparse_conv_apply.1} parent=0 // pred_region
    _
  $region13: #{sparse_conv_apply.1} parent=0 // pred_fallthru
    _
  %v14 = vld [vmem:[%s2] sm:$0x77]
  %v15 = vld [vmem:[%s0] sm:$0xff]
  %v16 = vld [vmem:[%s0 + $0x8] sm:$0xff]
  %v17 = vld [vmem:[%s0 + $0x10] sm:$0xff]
  %v19 = vlaneseq
  %v20 = vshrl.u32 %v19, 7
  %v21 = vsub.s32 0, %v20
  %v22 = vrot.slane %v14, %v21
  %v23 = vlaneseq
  %v24 = vshrl.u32 %v23, 7
  %v25 = vsub.s32 4, %v24
  %v26 = vrot.slane %v14, %v25
  %v29 = vlaneseq
  %v30 = vshrl.u32 %v29, 7
  %v31 = vsub.s32 0, %v30
  %v32 = vrot.slane %v22, %v31
  %v33 = vlaneseq
  %v34 = vshrl.u32 %v33, 7
  %v35 = vsub.s32 0, %v34
  %v36 = vrot.slane %v26, %v35
  %v37 = vmul.f32 %v15, %v32
  %v38 = vmul.f32 %v16, %v36
  %v39 = vlaneseq
  %v40 = vshrl.u32 %v39, 7
  %v41 = vsub.s32 2, %v40
  %v42 = vrot.slane %v14, %v41
  %v43 = vlaneseq
  %v44 = vshrl.u32 %v43, 7
  %v45 = vsub.s32 6, %v44
  %v46 = vrot.slane %v14, %v45
  %v49 = vlaneseq
  %v50 = vshrl.u32 %v49, 7
  %v51 = vsub.s32 2, %v50
  %v52 = vrot.slane %v42, %v51
  %v53 = vlaneseq
  %v54 = vshrl.u32 %v53, 7
  %v55 = vsub.s32 2, %v54
  %v56 = vrot.slane %v46, %v55
  %59 = vrot.lane.b32.xlu0 %v52, 2
  %v60 = vpop.permute.xlu0 %59
  %61 = vrot.lane.b32.xlu0 %v56, 2
  %v62 = vpop.permute.xlu0 %61
  %vm63 = vcmask 15360
  %v64 = vsel %vm63, %v60, %v62
  %v68 = vmul.f32 %v15, %v60
  %v69 = vmul.f32 %v16, %v64
  %v70 = vmul.f32 %v17, %v62
  %73 = vrot.lane.b32.xlu0 %v32, 16
  %v74 = vpop.permute.xlu0 %73
  %75 = vrot.lane.b32.xlu0 %v36, 16
  %v76 = vpop.permute.xlu0 %75
  %vm77 = vcmask 130048
  %v78 = vsel %vm77, %v74, %v76
  %v82 = vmul.f32 %v15, %v74
  %v83 = vmul.f32 %v16, %v78
  %v84 = vmul.f32 %v17, %v76
  %85 = vrot.lane.b32.xlu0 %v52, 18
  %v86 = vpop.permute.xlu0 %85
  %87 = vrot.lane.b32.xlu0 %v56, 18
  %v88 = vpop.permute.xlu0 %87
  %vm89 = vcmask 146432
  %v90 = vsel %vm89, %v86, %v88
  %v94 = vmul.f32 %v15, %v86
  %v95 = vmul.f32 %v16, %v90
  %v96 = vmul.f32 %v17, %v88
  %97 = vrot.lane.b32.xlu0 %v32, 32
  %v98 = vpop.permute.xlu0 %97
  %99 = vrot.lane.b32.xlu0 %v36, 32
  %v100 = vpop.permute.xlu0 %99
  %vm101 = vcmask 261120
  %v102 = vsel %vm101, %v98, %v100
  %v106 = vmul.f32 %v15, %v98
  %v107 = vmul.f32 %v16, %v102
  %v108 = vmul.f32 %v17, %v100
  %109 = vrot.lane.b32.xlu0 %v52, 34
  %v110 = vpop.permute.xlu0 %109
  %111 = vrot.lane.b32.xlu0 %v56, 34
  %v112 = vpop.permute.xlu0 %111
  %vm113 = vcmask 277504
  %v114 = vsel %vm113, %v110, %v112
  %v118 = vmul.f32 %v15, %v110
  %v119 = vmul.f32 %v16, %v114
  %v120 = vmul.f32 %v17, %v112
  %124 = vrot.lane.b32.xlu0 %v15, 127
  %v125 = vpop.permute.xlu0 %124
  %126 = vrot.lane.b32.xlu0 %v16, 127
  %v127 = vpop.permute.xlu0 %126
  %128 = vrot.lane.b32.xlu0 %v17, 127
  %v129 = vpop.permute.xlu0 %128
  %vm130 = vcmask 1039360
  %v131 = vsel %vm130, %v125, %v127
  %v132 = vsel %vm130, %v127, %v129
  %138 = vrot.lane.b32.xlu0 %v68, 126
  %v139 = vpop.permute.xlu0 %138
  %140 = vrot.lane.b32.xlu0 %v69, 126
  %v141 = vpop.permute.xlu0 %140
  %142 = vrot.lane.b32.xlu0 %v70, 126
  %v143 = vpop.permute.xlu0 %142
  %vm144 = vcmask 1031168
  %v145 = vsel %vm144, %v139, %v141
  %v146 = vsel %vm144, %v141, %v143
  %152 = vrot.lane.b32.xlu0 %v82, 112
  %v153 = vpop.permute.xlu0 %152
  %154 = vrot.lane.b32.xlu0 %v83, 112
  %v155 = vpop.permute.xlu0 %154
  %156 = vrot.lane.b32.xlu0 %v84, 112
  %v157 = vpop.permute.xlu0 %156
  %vm158 = vcmask 916480
  %v159 = vsel %vm158, %v153, %v155
  %v160 = vsel %vm158, %v155, %v157
  %163 = vrot.lane.b32.xlu0 %v15, 111
  %v164 = vpop.permute.xlu0 %163
  %165 = vrot.lane.b32.xlu0 %v16, 111
  %v166 = vpop.permute.xlu0 %165
  %167 = vrot.lane.b32.xlu0 %v17, 111
  %v168 = vpop.permute.xlu0 %167
  %vm169 = vcmask 908288
  %v170 = vsel %vm169, %v164, %v166
  %v171 = vsel %vm169, %v166, %v168
  %177 = vrot.lane.b32.xlu0 %v94, 110
  %v178 = vpop.permute.xlu0 %177
  %179 = vrot.lane.b32.xlu0 %v95, 110
  %v180 = vpop.permute.xlu0 %179
  %181 = vrot.lane.b32.xlu0 %v96, 110
  %v182 = vpop.permute.xlu0 %181
  %vm183 = vcmask 900096
  %v184 = vsel %vm183, %v178, %v180
  %v185 = vsel %vm183, %v180, %v182
  %191 = vrot.lane.b32.xlu0 %v106, 96
  %v192 = vpop.permute.xlu0 %191
  %193 = vrot.lane.b32.xlu0 %v107, 96
  %v194 = vpop.permute.xlu0 %193
  %195 = vrot.lane.b32.xlu0 %v108, 96
  %v196 = vpop.permute.xlu0 %195
  %vm197 = vcmask 785408
  %v198 = vsel %vm197, %v192, %v194
  %v199 = vsel %vm197, %v194, %v196
  %202 = vrot.lane.b32.xlu0 %v15, 95
  %v203 = vpop.permute.xlu0 %202
  %204 = vrot.lane.b32.xlu0 %v16, 95
  %v205 = vpop.permute.xlu0 %204
  %206 = vrot.lane.b32.xlu0 %v17, 95
  %v207 = vpop.permute.xlu0 %206
  %vm208 = vcmask 777216
  %v209 = vsel %vm208, %v203, %v205
  %v210 = vsel %vm208, %v205, %v207
  %216 = vrot.lane.b32.xlu0 %v118, 94
  %v217 = vpop.permute.xlu0 %216
  %218 = vrot.lane.b32.xlu0 %v119, 94
  %v219 = vpop.permute.xlu0 %218
  %220 = vrot.lane.b32.xlu0 %v120, 94
  %v221 = vpop.permute.xlu0 %220
  %vm222 = vcmask 769024
  %v223 = vsel %vm222, %v217, %v219
  %v224 = vsel %vm222, %v219, %v221
  %s227 = scalar_lea.vmem %s0, 24
  %v228 = vld [vmem:[%s227] sm:$0xff]
  %v229 = vld [vmem:[%s227 + $0x8] sm:$0xff]
  %v230 = vld [vmem:[%s227 + $0x10] sm:$0xff]
  %v231 = vmul.f32 %v228, %v32
  %v232 = vmul.f32 %v229, %v36
  %v233 = vmul.f32 %v228, %v60
  %v234 = vmul.f32 %v229, %v64
  %v235 = vmul.f32 %v230, %v62
  %v236 = vmul.f32 %v228, %v74
  %v237 = vmul.f32 %v229, %v78
  %v238 = vmul.f32 %v230, %v76
  %v239 = vmul.f32 %v228, %v86
  %v240 = vmul.f32 %v229, %v90
  %v241 = vmul.f32 %v230, %v88
  %v242 = vmul.f32 %v228, %v98
  %v243 = vmul.f32 %v229, %v102
  %v244 = vmul.f32 %v230, %v100
  %v245 = vmul.f32 %v228, %v110
  %v246 = vmul.f32 %v229, %v114
  %v247 = vmul.f32 %v230, %v112
  %251 = vrot.lane.b32.xlu0 %v228, 127
  %v252 = vpop.permute.xlu0 %251
  %253 = vrot.lane.b32.xlu0 %v229, 127
  %v254 = vpop.permute.xlu0 %253
  %255 = vrot.lane.b32.xlu0 %v230, 127
  %v256 = vpop.permute.xlu0 %255
  %v257 = vsel %vm130, %v252, %v254
  %v258 = vsel %vm130, %v254, %v256
  %264 = vrot.lane.b32.xlu0 %v233, 126
  %v265 = vpop.permute.xlu0 %264
  %266 = vrot.lane.b32.xlu0 %v234, 126
  %v267 = vpop.permute.xlu0 %266
  %268 = vrot.lane.b32.xlu0 %v235, 126
  %v269 = vpop.permute.xlu0 %268
  %v270 = vsel %vm144, %v265, %v267
  %v271 = vsel %vm144, %v267, %v269
  %277 = vrot.lane.b32.xlu0 %v236, 112
  %v278 = vpop.permute.xlu0 %277
  %279 = vrot.lane.b32.xlu0 %v237, 112
  %v280 = vpop.permute.xlu0 %279
  %281 = vrot.lane.b32.xlu0 %v238, 112
  %v282 = vpop.permute.xlu0 %281
  %v283 = vsel %vm158, %v278, %v280
  %v284 = vsel %vm158, %v280, %v282
  %287 = vrot.lane.b32.xlu0 %v228, 111
  %v288 = vpop.permute.xlu0 %287
  %289 = vrot.lane.b32.xlu0 %v229, 111
  %v290 = vpop.permute.xlu0 %289
  %291 = vrot.lane.b32.xlu0 %v230, 111
  %v292 = vpop.permute.xlu0 %291
  %v293 = vsel %vm169, %v288, %v290
  %v294 = vsel %vm169, %v290, %v292
  %300 = vrot.lane.b32.xlu0 %v239, 110
  %v301 = vpop.permute.xlu0 %300
  %302 = vrot.lane.b32.xlu0 %v240, 110
  %v303 = vpop.permute.xlu0 %302
  %304 = vrot.lane.b32.xlu0 %v241, 110
  %v305 = vpop.permute.xlu0 %304
  %v306 = vsel %vm183, %v301, %v303
  %v307 = vsel %vm183, %v303, %v305
  %313 = vrot.lane.b32.xlu0 %v242, 96
  %v314 = vpop.permute.xlu0 %313
  %315 = vrot.lane.b32.xlu0 %v243, 96
  %v316 = vpop.permute.xlu0 %315
  %317 = vrot.lane.b32.xlu0 %v244, 96
  %v318 = vpop.permute.xlu0 %317
  %v319 = vsel %vm197, %v314, %v316
  %v320 = vsel %vm197, %v316, %v318
  %323 = vrot.lane.b32.xlu0 %v228, 95
  %v324 = vpop.permute.xlu0 %323
  %325 = vrot.lane.b32.xlu0 %v229, 95
  %v326 = vpop.permute.xlu0 %325
  %327 = vrot.lane.b32.xlu0 %v230, 95
  %v328 = vpop.permute.xlu0 %327
  %v329 = vsel %vm208, %v324, %v326
  %v330 = vsel %vm208, %v326, %v328
  %336 = vrot.lane.b32.xlu0 %v245, 94
  %v337 = vpop.permute.xlu0 %336
  %338 = vrot.lane.b32.xlu0 %v246, 94
  %v339 = vpop.permute.xlu0 %338
  %340 = vrot.lane.b32.xlu0 %v247, 94
  %v341 = vpop.permute.xlu0 %340
  %v342 = vsel %vm222, %v337, %v339
  %v343 = vsel %vm222, %v339, %v341
  %v346 = vld [vmem:[%s1] sm:$0xff]
  %vm347 = vcmask 596992
  %v349 = vsel %vm347, %v346, 0
  %vm351 = vcmask 1040384
  %v353 = vsel %vm351, 1.0, 0
  %355 = vmatprep.subr.mxu0 0.0
  %356 = vmatpush1.msra.mxu0 0.0
  %357 = vmatprep.subr.mxu0 0.0
  %358 = vmatpush1.msra.mxu0 0.0
  %359 = vmatprep.subr.mxu0 0.0
  %360 = vmatpush1.msra.mxu0 0.0
  %361 = vmatprep.subr.mxu0 0.0
  %362 = vmatpush1.msra.mxu0 0.0
  %363 = vmatprep.subr.mxu0 0.0
  %364 = vmatpush1.msra.mxu0 0.0
  %365 = vmatprep.subr.mxu0 0.0
  %366 = vmatpush1.msra.mxu0 0.0
  %367 = vmatprep.subr.mxu0 %v353
  %368 = vmatpush1.msra.mxu0 %v353
  %369 = vmatprep.subr.mxu0 %v224
  %370 = vmatpush1.msra.mxu0 %v223
  %371 = vmatprep.subr.mxu0 %v210
  %372 = vmatpush1.msra.mxu0 %v209
  %373 = vmatprep.subr.mxu0 %v199
  %374 = vmatpush1.msra.mxu0 %v198
  %375 = vmatprep.subr.mxu0 %v185
  %376 = vmatpush1.msra.mxu0 %v184
  %377 = vmatprep.subr.mxu0 %v171
  %378 = vmatpush1.msra.mxu0 %v170
  %379 = vmatprep.subr.mxu0 %v160
  %380 = vmatpush1.msra.mxu0 %v159
  %381 = vmatprep.subr.mxu0 %v146
  %382 = vmatpush1.msra.mxu0 %v145
  %383 = vmatprep.subr.mxu0 %v132
  %384 = vmatpush1.msra.mxu0 %v131
  %385 = vmatprep.subr.mxu0 %v38
  %386 = vmatpush1.msra.mxu0 %v37
  %387 = vmatprep.subr.mxu0 0.0
  %388 = vmatpush2.msra.mxu0 0.0
  %389 = vmatprep.subr.mxu0 0.0
  %390 = vmatpush2.msra.mxu0 0.0
  %391 = vmatprep.subr.mxu0 0.0
  %392 = vmatpush2.msra.mxu0 0.0
  %393 = vmatprep.subr.mxu0 0.0
  %394 = vmatpush2.msra.mxu0 0.0
  %395 = vmatprep.subr.mxu0 0.0
  %396 = vmatpush2.msra.mxu0 0.0
  %397 = vmatprep.subr.mxu0 0.0
  %398 = vmatpush2.msra.mxu0 0.0
  %399 = vmatprep.subr.mxu0 0.0
  %400 = vmatpush2.msra.mxu0 0.0
  %401 = vmatprep.subr.mxu0 0.0
  %402 = vmatpush2.msra.mxu0 0.0
  %403 = vmatprep.subr.mxu0 0.0
  %404 = vmatpush2.msra.mxu0 0.0
  %405 = vmatprep.subr.mxu0 0.0
  %406 = vmatpush2.msra.mxu0 0.0
  %407 = vmatprep.subr.mxu0 0.0
  %408 = vmatpush2.msra.mxu0 0.0
  %409 = vmatprep.subr.mxu0 0.0
  %410 = vmatpush2.msra.mxu0 0.0
  %411 = vmatprep.subr.mxu0 0.0
  %412 = vmatpush2.msra.mxu0 0.0
  %413 = vmatprep.subr.mxu0 0.0
  %414 = vmatpush2.msra.mxu0 0.0
  %415 = vmatprep.subr.mxu0 0.0
  %416 = vmatpush2.msra.mxu0 0.0
  %417 = vmatprep.subr.mxu0 0.0
  %418 = vmatpush2.msra.mxu0 0.0
  %419 = vmatprep.mubr.f32.mxu0 0.0
  %420 = vmatmul.mubr.f32.gmra.mxu0 %v349
  %v421 = vpop.f32.mrf.mxu0
  %v422 = vadd.f32 0.0, %v421
  %v423 = vpop.f32.mrf.mxu0
  %v424 = vadd.f32 0.0, %v423
  %425 = vdwg.mxu0
  %426 = vmatprep.subr.mxu0 0.0
  %427 = vmatpush1.msra.mxu0 0.0
  %428 = vmatprep.subr.mxu0 0.0
  %429 = vmatpush1.msra.mxu0 0.0
  %430 = vmatprep.subr.mxu0 0.0
  %431 = vmatpush1.msra.mxu0 0.0
  %432 = vmatprep.subr.mxu0 0.0
  %433 = vmatpush1.msra.mxu0 0.0
  %434 = vmatprep.subr.mxu0 0.0
  %435 = vmatpush1.msra.mxu0 0.0
  %436 = vmatprep.subr.mxu0 0.0
  %437 = vmatpush1.msra.mxu0 0.0
  %438 = vmatprep.subr.mxu0 %v353
  %439 = vmatpush1.msra.mxu0 %v353
  %440 = vmatprep.subr.mxu0 %v343
  %441 = vmatpush1.msra.mxu0 %v342
  %442 = vmatprep.subr.mxu0 %v330
  %443 = vmatpush1.msra.mxu0 %v329
  %444 = vmatprep.subr.mxu0 %v320
  %445 = vmatpush1.msra.mxu0 %v319
  %446 = vmatprep.subr.mxu0 %v307
  %447 = vmatpush1.msra.mxu0 %v306
  %448 = vmatprep.subr.mxu0 %v294
  %449 = vmatpush1.msra.mxu0 %v293
  %450 = vmatprep.subr.mxu0 %v284
  %451 = vmatpush1.msra.mxu0 %v283
  %452 = vmatprep.subr.mxu0 %v271
  %453 = vmatpush1.msra.mxu0 %v270
  %454 = vmatprep.subr.mxu0 %v258
  %455 = vmatpush1.msra.mxu0 %v257
  %456 = vmatprep.subr.mxu0 %v232
  %457 = vmatpush1.msra.mxu0 %v231
  %458 = vmatprep.subr.mxu0 0.0
  %459 = vmatpush2.msra.mxu0 0.0
  %460 = vmatprep.subr.mxu0 0.0
  %461 = vmatpush2.msra.mxu0 0.0
  %462 = vmatprep.subr.mxu0 0.0
  %463 = vmatpush2.msra.mxu0 0.0
  %464 = vmatprep.subr.mxu0 0.0
  %465 = vmatpush2.msra.mxu0 0.0
  %466 = vmatprep.subr.mxu0 0.0
  %467 = vmatpush2.msra.mxu0 0.0
  %468 = vmatprep.subr.mxu0 0.0
  %469 = vmatpush2.msra.mxu0 0.0
  %470 = vmatprep.subr.mxu0 0.0
  %471 = vmatpush2.msra.mxu0 0.0
  %472 = vmatprep.subr.mxu0 0.0
  %473 = vmatpush2.msra.mxu0 0.0
  %474 = vmatprep.subr.mxu0 0.0
  %475 = vmatpush2.msra.mxu0 0.0
  %476 = vmatprep.subr.mxu0 0.0
  %477 = vmatpush2.msra.mxu0 0.0
  %478 = vmatprep.subr.mxu0 0.0
  %479 = vmatpush2.msra.mxu0 0.0
  %480 = vmatprep.subr.mxu0 0.0
  %481 = vmatpush2.msra.mxu0 0.0
  %482 = vmatprep.subr.mxu0 0.0
  %483 = vmatpush2.msra.mxu0 0.0
  %484 = vmatprep.subr.mxu0 0.0
  %485 = vmatpush2.msra.mxu0 0.0
  %486 = vmatprep.subr.mxu0 0.0
  %487 = vmatpush2.msra.mxu0 0.0
  %488 = vmatprep.subr.mxu0 0.0
  %489 = vmatpush2.msra.mxu0 0.0
  %490 = vmatprep.mubr.f32.mxu0 0.0
  %491 = vmatmul.mubr.f32.gmra.mxu0 %v349
  %v492 = vpop.f32.mrf.mxu0
  %v493 = vadd.f32 0.0, %v492
  %v494 = vpop.f32.mrf.mxu0
  %v495 = vadd.f32 0.0, %v494
  %496 = vdwg.mxu0
  %497 = vst [vmem:[%s3] sm:$0xff] %v422
  %498 = vst [vmem:[%s3 + $0x8] sm:$0xff] %v424
  %s499 = scalar_lea.vmem %s3, 16
  %500 = vst [vmem:[%s499] sm:$0xff] %v493
  %501 = vst [vmem:[%s499 + $0x8] sm:$0xff] %v495
  // Predicated region
  $region14: #{sparse_conv_apply.1} parent=0 // pred_check
    _
  $region15: #{sparse_conv_apply.1} parent=0 // pred_check_branch
    %503 = sbr.rel (0) target = $region17
  $region16: #{sparse_conv_apply.1} parent=0 // pred_region
    _
  $region17: #{sparse_conv_apply.1} parent=0 // pred_fallthru
    _
  // Predicated region
  $region18: #{sparse_conv_apply.1} parent=0 // pred_check
    _
  $region19: #{sparse_conv_apply.1} parent=0 // pred_check_branch
    %505 = sbr.rel (0) target = $region21
  $region20: #{sparse_conv_apply.1} parent=0 // pred_region
    _
  $region21: #{sparse_conv_apply.1} parent=0 // pred_fallthru
    _

</llo_original>
